<compile_context>
chip_gen: v5e
topology: v5e:2x2
jax: 0.10.0
libtpu: 0.0.40
codegen_flags: <defaults>
</compile_context>

<pallas_src>
import jax
import jax.numpy as jnp
from jax import lax
from jax.experimental import pallas as pl
from jax.experimental.pallas import tpu as pltpu


def cosine_sim_kernel(x1_ref, x2_ref, o_ref):
    x1 = x1_ref[...]          # (TM, D)
    x2 = x2_ref[...]          # (TN, D)

    # x1 @ x2^T on the MXU without materializing a transpose:
    # contract over the last dim of both operands (native orientation).
    dots = lax.dot_general(
        x1, x2,
        dimension_numbers=(((1,), (1,)), ((), ())),
        preferred_element_type=jnp.float32,
    )                                                           # (TM, TN)

    # Inverse row norms via rsqrt (EUP slot), then a cheap VPU broadcast
    # multiply — replaces the old (TM,1)@(1,TN) matmul + M*N reciprocals.
    x1f = x1.astype(jnp.float32)
    x2f = x2.astype(jnp.float32)
    inv_n1 = lax.rsqrt(jnp.sum(x1f * x1f, axis=1, keepdims=True))   # (TM, 1)
    inv_n2 = lax.rsqrt(jnp.sum(x2f * x2f, axis=1, keepdims=True))   # (TN, 1)

    o_ref[...] = (dots * inv_n1 * inv_n2.T).astype(o_ref.dtype)


def _round_up(a, b):
    return (a + b - 1) // b * b


def cosine_similarity_matrix(x1, x2, *, tm=256, tn=256):
    """x1: (M, D), x2: (N, D) -> (M, N) cosine-similarity matrix."""
    M, D = x1.shape
    N, D2 = x2.shape
    assert D == D2, "inner dims must match"

    # Lane-dense output tiles: TN multiple of 128, TM multiple of 8
    # (clamped so tiny problems stay a single small block).
    tm = min(tm, _round_up(M, 8))
    tn = min(tn, _round_up(N, 128))
    Mp = _round_up(M, tm)
    Np = _round_up(N, tn)

    x1p = x1 if Mp == M else jnp.pad(x1, ((0, Mp - M), (0, 0)))
    x2p = x2 if Np == N else jnp.pad(x2, ((0, Np - N), (0, 0)))

    # TODO(synk): for very large D add a K grid axis ("arbitrary") with a f32
    # VMEM accumulator; D here is small enough to keep the full contraction
    # dim in a single block.
    out = pl.pallas_call(
        cosine_sim_kernel,
        out_shape=jax.ShapeDtypeStruct((Mp, Np), x1.dtype),
        grid=(Mp // tm, Np // tn),
        in_specs=[
            pl.BlockSpec((tm, D), lambda i, j: (i, 0)),
            pl.BlockSpec((tn, D), lambda i, j: (j, 0)),
        ],
        out_specs=pl.BlockSpec((tm, tn), lambda i, j: (i, j)),
        compiler_params=pltpu.CompilerParams(
            dimension_semantics=("parallel", "parallel")),
    )(x1p, x2p)

    return out[:M, :N]


if __name__ == "__main__":
    key = jax.random.PRNGKey(0)
    k1, k2 = jax.random.split(key)

    M, N, D = 16, 8, 32
    x1 = jax.random.normal(k1, (M, D), dtype=jnp.float32)
    x2 = jax.random.normal(k2, (N, D), dtype=jnp.float32)

    out = jax.block_until_ready(cosine_similarity_matrix(x1, x2))

    # Reference check in plain JAX (mirrors the PyTorch forward exactly).
    x2t = x2.T
    ref = (x1 @ x2t) * (
        1.0
        / (
            jnp.linalg.norm(x1, axis=1)[:, None]
            @ jnp.linalg.norm(x2t, axis=0)[None, :]
        )
    )
    assert out.shape == (M, N)
    assert jnp.allclose(out, ref, atol=1e-5, rtol=1e-5)

    print("KERNEL_OK")
</pallas_src>

<mosaic_0001>
module attributes {stable_mosaic.version = 11 : i64} {
  func.func @cosine_sim_kernel(%arg0: i32, %arg1: i32, %arg2: memref<16x32xf32, #tpu.memory_space<vmem>>, %arg3: memref<128x32xf32, #tpu.memory_space<vmem>>, %arg4: memref<16x128xf32, #tpu.memory_space<vmem>>) attributes {dimension_semantics = [#tpu.dimension_semantics<parallel>, #tpu.dimension_semantics<parallel>], iteration_bounds = array<i64: 1, 1>, scalar_prefetch = 0 : i64, scratch_operands = 0 : i64, tpu.core_type = #tpu.core_type<tc>, window_params = [{transform_indices = @transform_0, window_bounds = array<i64: 16, 32>}, {transform_indices = @transform_1, window_bounds = array<i64: 128, 32>}, {transform_indices = @transform_2, window_bounds = array<i64: 16, 128>}]} {
    %c0 = arith.constant 0 : index
    %c0_0 = arith.constant 0 : index
    %0 = vector.load %arg2[%c0, %c0_0] : memref<16x32xf32, #tpu.memory_space<vmem>>, vector<16x32xf32>
    %c0_1 = arith.constant 0 : index
    %c0_2 = arith.constant 0 : index
    %1 = vector.load %arg3[%c0_1, %c0_2] : memref<128x32xf32, #tpu.memory_space<vmem>>, vector<128x32xf32>
    %cst = arith.constant dense<0.000000e+00> : vector<16x128xf32>
    %2 = tpu.matmul %0, %1, %cst {dimension_numbers = #tpu.dot_dimension_numbers<[1], [1], [0], [0], [0, 0, 1, 0], [], []>} : vector<16x32xf32>, vector<128x32xf32>, vector<16x128xf32> -> vector<16x128xf32>
    %3 = arith.mulf %0, %0 : vector<16x32xf32>
    %cst_3 = arith.constant dense<0.000000e+00> : vector<16xf32>
    %4 = vector.multi_reduction <add>, %3, %cst_3 [1] : vector<16x32xf32> to vector<16xf32>
    %5 = vector.shape_cast %4 : vector<16xf32> to vector<16x1xf32>
    %6 = math.rsqrt %5 : vector<16x1xf32>
    %7 = arith.mulf %1, %1 : vector<128x32xf32>
    %cst_4 = arith.constant dense<0.000000e+00> : vector<128xf32>
    %8 = vector.multi_reduction <add>, %7, %cst_4 [1] : vector<128x32xf32> to vector<128xf32>
    %9 = vector.shape_cast %8 : vector<128xf32> to vector<128x1xf32>
    %10 = math.rsqrt %9 : vector<128x1xf32>
    %11 = vector.broadcast %6 : vector<16x1xf32> to vector<16x128xf32>
    %12 = arith.mulf %2, %11 : vector<16x128xf32>
    %13 = tpu.transpose %10, [1, 0] : vector<128x1xf32> -> vector<1x128xf32>
    %14 = vector.broadcast %13 : vector<1x128xf32> to vector<16x128xf32>
    %15 = arith.mulf %12, %14 : vector<16x128xf32>
    %c0_5 = arith.constant 0 : index
    %c0_6 = arith.constant 0 : index
    %16 = vector.load %arg4[%c0_5, %c0_6] : memref<16x128xf32, #tpu.memory_space<vmem>>, vector<16x128xf32>
    tpu.vector_store %arg4[%c0_5, %c0_6], %15 {strides = array<i32>} : memref<16x128xf32, #tpu.memory_space<vmem>>, vector<16x128xf32>,
    return
  }
  func.func @transform_0(%arg0: i32, %arg1: i32) -> (i32, i32) {
    %c0_i32 = arith.constant 0 : i32
    %c0_i32_0 = arith.constant 0 : i32
    return %arg0, %c0_i32 : i32, i32
  }
  func.func @transform_1(%arg0: i32, %arg1: i32) -> (i32, i32) {
    %c0_i32 = arith.constant 0 : i32
    %c0_i32_0 = arith.constant 0 : i32
    return %arg1, %c0_i32 : i32, i32
  }
  func.func @transform_2(%arg0: i32, %arg1: i32) -> (i32, i32) {
    %c0_i32 = arith.constant 0 : i32
    return %arg0, %arg1 : i32, i32
  }
}

</mosaic_0001>

<llo_original>
// kernel: tpu_custom_call.1
$region0: #{tpu_custom_call.1}
  #allocation0 [shape = 'u32[]', space=smem, size = 0x4, offset = 0x4, fixed_abs, tag = 'smem constant byte address 0x4 - core index']
  #allocation1 [shape = 'u32[72,128]{1,0:T(1,128)}', space=vmem, size = 0x9000, scoped, tag = 'internal scratch']
  %s0 = inlined_call_operand.vmem [shape: f32[16,32], index: 0, kind: input, shape index: {}]
  %s1 = inlined_call_operand.vmem [shape: f32[128,32], index: 1, kind: input, shape index: {}]
  %s2 = inlined_call_operand.hbm [shape: f32[16,128], index: 2, kind: output, shape index: {}]
  %s3 = sld [smem:[#allocation0]]
  $region18: #{tpu_custom_call.1} parent=0
    _
  %s5 = ssub.s32 1, %s3
  %s6 = scalar_select 0, %s5, %s3
  $region1: #{tpu_custom_call.1} parent=0
    #allocation2 [shape = 'u8[8192]{0}', space=vmem, size = 0x2000, scoped, tag = 'output window, operand 0, single buffered']
    #allocation3 [shape = 's32[1]{0}', space=sflag, size = 0x4, scoped, tag = 'scoped memory for tpu_custom_call.1']
    %7 = vsyncpa [#allocation3], 0
    // Predicated region
    $region2: #{tpu_custom_call.1} parent=1 // pred_check
      _
    $region3: #{tpu_custom_call.1} parent=1 // pred_check_branch
      %9 = sbr.rel (0) target = $region5
    $region4: #{tpu_custom_call.1} parent=1 // pred_region
      _
    $region5: #{tpu_custom_call.1} parent=1 // pred_fallthru
      _
    // Predicated region
    $region6: #{tpu_custom_call.1} parent=1 // pred_check
      _
    $region7: #{tpu_custom_call.1} parent=1 // pred_check_branch
      %11 = sbr.rel (0) target = $region9
    $region8: #{tpu_custom_call.1} parent=1 // pred_region
      _
    $region9: #{tpu_custom_call.1} parent=1 // pred_fallthru
      _
    %v12 = vld [vmem:[%s0] sm:$0xff]
    %v13 = vld [vmem:[%s0 + $0x8] sm:$0xff]
    %v14 = vld [vmem:[%s1] sm:$0xff]
    %v15 = vld [vmem:[%s1 + $0x8] sm:$0xff]
    %v16 = vld [vmem:[%s1 + $0x10] sm:$0xff]
    %v17 = vld [vmem:[%s1 + $0x18] sm:$0xff]
    %v18 = vld [vmem:[%s1 + $0x20] sm:$0xff]
    %v19 = vld [vmem:[%s1 + $0x28] sm:$0xff]
    %v20 = vld [vmem:[%s1 + $0x30] sm:$0xff]
    %v21 = vld [vmem:[%s1 + $0x38] sm:$0xff]
    %v22 = vld [vmem:[%s1 + $0x40] sm:$0xff]
    %v23 = vld [vmem:[%s1 + $0x48] sm:$0xff]
    %v24 = vld [vmem:[%s1 + $0x50] sm:$0xff]
    %v25 = vld [vmem:[%s1 + $0x58] sm:$0xff]
    %v26 = vld [vmem:[%s1 + $0x60] sm:$0xff]
    %v27 = vld [vmem:[%s1 + $0x68] sm:$0xff]
    %v28 = vld [vmem:[%s1 + $0x70] sm:$0xff]
    %v29 = vld [vmem:[%s1 + $0x78] sm:$0xff]
    %vm30 = vcmask 261120
    %v32 = vsel %vm30, %v12, 0
    %v35 = vsel %vm30, %v13, 0
    %v38 = vsel %vm30, %v14, 0
    %v41 = vsel %vm30, %v15, 0
    %v44 = vsel %vm30, %v16, 0
    %v47 = vsel %vm30, %v17, 0
    %v50 = vsel %vm30, %v18, 0
    %v53 = vsel %vm30, %v19, 0
    %v56 = vsel %vm30, %v20, 0
    %v59 = vsel %vm30, %v21, 0
    %v62 = vsel %vm30, %v22, 0
    %v65 = vsel %vm30, %v23, 0
    %v68 = vsel %vm30, %v24, 0
    %v71 = vsel %vm30, %v25, 0
    %v74 = vsel %vm30, %v26, 0
    %v77 = vsel %vm30, %v27, 0
    %v80 = vsel %vm30, %v28, 0
    %v83 = vsel %vm30, %v29, 0
    %85 = vmatpush.xpose.msra.mxu0 %v83
    %86 = vmatpush.xpose.msra.mxu0 %v80
    %87 = vmatpush.xpose.msra.mxu0 %v77
    %88 = vmatpush.xpose.msra.mxu0 %v74
    %89 = vmatpush.xpose.msra.mxu0 %v71
    %90 = vmatpush.xpose.msra.mxu0 %v68
    %91 = vmatpush.xpose.msra.mxu0 %v65
    %92 = vmatpush.xpose.msra.mxu0 %v62
    %93 = vmatpush.xpose.msra.mxu0 %v59
    %94 = vmatpush.xpose.msra.mxu0 %v56
    %95 = vmatpush.xpose.msra.mxu0 %v53
    %96 = vmatpush.xpose.msra.mxu0 %v50
    %97 = vmatpush.xpose.msra.mxu0 %v47
    %98 = vmatpush.xpose.msra.mxu0 %v44
    %99 = vmatpush.xpose.msra.mxu0 %v41
    %100 = vmatpush.xpose.msra.mxu0 %v38
    %101 = vmatmul.f32.gmra.mxu0 %v32
    %v102 = vpop.f32.mrf.mxu0
    %v103 = vadd.f32 0.0, %v102
    %104 = vmatmul.f32.gmra.mxu0 %v35
    %v105 = vpop.f32.mrf.mxu0
    %v106 = vadd.f32 0.0, %v105
    %107 = vdwg.mxu0
    %v108 = vmul.f32 %v12, %v12
    %v109 = vmul.f32 %v13, %v13
    %v110 = vsel %vm30, %v108, 0.0
    %111 = vadd.xlane.f32.xlu0 %v110
    %v112 = vpop.xlane.xlu0 %111
    %v113 = vsel %vm30, %v109, 0.0
    %114 = vadd.xlane.f32.xlu0 %v113
    %v115 = vpop.xlane.xlu0 %114
    %v116 = vrsqrt.pop %v112
    %v117 = vmul.f32 %v116, %v112
    %v118 = vmul.f32 %v117, %v116
    %v119 = vmul.f32 0.5, %v118
    %v120 = vsub.f32 1.5, %v119
    %v121 = vmul.f32 %v116, %v120
    %vm122 = vweird.f32 %v112
    %vm123 = vweird.f32 %v116
    %vm124 = vmor %vm122, %vm123
    %v125 = vsel %vm124, %v116, %v121
    %v126 = vrsqrt.pop %v115
    %v127 = vmul.f32 %v126, %v115
    %v128 = vmul.f32 %v127, %v126
    %v129 = vmul.f32 0.5, %v128
    %v130 = vsub.f32 1.5, %v129
    %v131 = vmul.f32 %v126, %v130
    %vm132 = vweird.f32 %v115
    %vm133 = vweird.f32 %v126
    %vm134 = vmor %vm132, %vm133
    %v135 = vsel %vm134, %v126, %v131
    %v136 = vmul.f32 %v14, %v14
    %v137 = vmul.f32 %v15, %v15
    %v138 = vmul.f32 %v16, %v16
    %v139 = vmul.f32 %v17, %v17
    %v140 = vmul.f32 %v18, %v18
    %v141 = vmul.f32 %v19, %v19
    %v142 = vmul.f32 %v20, %v20
    %v143 = vmul.f32 %v21, %v21
    %v144 = vmul.f32 %v22, %v22
    %v145 = vmul.f32 %v23, %v23
    %v146 = vmul.f32 %v24, %v24
    %v147 = vmul.f32 %v25, %v25
    %v148 = vmul.f32 %v26, %v26
    %v149 = vmul.f32 %v27, %v27
    %v150 = vmul.f32 %v28, %v28
    %v151 = vmul.f32 %v29, %v29
    %v152 = vsel %vm30, %v136, 0.0
    %153 = vadd.xlane.f32.xlu0 %v152
    %v154 = vpop.xlane.xlu0 %153
    %v155 = vsel %vm30, %v137, 0.0
    %156 = vadd.xlane.f32.xlu0 %v155
    %v157 = vpop.xlane.xlu0 %156
    %v158 = vsel %vm30, %v138, 0.0
    %159 = vadd.xlane.f32.xlu0 %v158
    %v160 = vpop.xlane.xlu0 %159
    %v161 = vsel %vm30, %v139, 0.0
    %162 = vadd.xlane.f32.xlu0 %v161
    %v163 = vpop.xlane.xlu0 %162
    %v164 = vsel %vm30, %v140, 0.0
    %165 = vadd.xlane.f32.xlu0 %v164
    %v166 = vpop.xlane.xlu0 %165
    %v167 = vsel %vm30, %v141, 0.0
    %168 = vadd.xlane.f32.xlu0 %v167
    %v169 = vpop.xlane.xlu0 %168
    %v170 = vsel %vm30, %v142, 0.0
    %171 = vadd.xlane.f32.xlu0 %v170
    %v172 = vpop.xlane.xlu0 %171
    %v173 = vsel %vm30, %v143, 0.0
    %174 = vadd.xlane.f32.xlu0 %v173
    %v175 = vpop.xlane.xlu0 %174
    %v176 = vsel %vm30, %v144, 0.0
    %177 = vadd.xlane.f32.xlu0 %v176
    %v178 = vpop.xlane.xlu0 %177
    %v179 = vsel %vm30, %v145, 0.0
    %180 = vadd.xlane.f32.xlu0 %v179
    %v181 = vpop.xlane.xlu0 %180
    %v182 = vsel %vm30, %v146, 0.0
    %183 = vadd.xlane.f32.xlu0 %v182
    %v184 = vpop.xlane.xlu0 %183
    %v185 = vsel %vm30, %v147, 0.0
    %186 = vadd.xlane.f32.xlu0 %v185
    %v187 = vpop.xlane.xlu0 %186
    %v188 = vsel %vm30, %v148, 0.0
    %189 = vadd.xlane.f32.xlu0 %v188
    %v190 = vpop.xlane.xlu0 %189
    %v191 = vsel %vm30, %v149, 0.0
    %192 = vadd.xlane.f32.xlu0 %v191
    %v193 = vpop.xlane.xlu0 %192
    %v194 = vsel %vm30, %v150, 0.0
    %195 = vadd.xlane.f32.xlu0 %v194
    %v196 = vpop.xlane.xlu0 %195
    %v197 = vsel %vm30, %v151, 0.0
    %198 = vadd.xlane.f32.xlu0 %v197
    %v199 = vpop.xlane.xlu0 %198
    %v200 = vrsqrt.pop %v154
    %v201 = vmul.f32 %v200, %v154
    %v202 = vmul.f32 %v201, %v200
    %v203 = vmul.f32 0.5, %v202
    %v204 = vsub.f32 1.5, %v203
    %v205 = vmul.f32 %v200, %v204
    %vm206 = vweird.f32 %v154
    %vm207 = vweird.f32 %v200
    %vm208 = vmor %vm206, %vm207
    %v209 = vsel %vm208, %v200, %v205
    %v210 = vrsqrt.pop %v157
    %v211 = vmul.f32 %v210, %v157
    %v212 = vmul.f32 %v211, %v210
    %v213 = vmul.f32 0.5, %v212
    %v214 = vsub.f32 1.5, %v213
    %v215 = vmul.f32 %v210, %v214
    %vm216 = vweird.f32 %v157
    %vm217 = vweird.f32 %v210
    %vm218 = vmor %vm216, %vm217
    %v219 = vsel %vm218, %v210, %v215
    %v220 = vrsqrt.pop %v160
    %v221 = vmul.f32 %v220, %v160
    %v222 = vmul.f32 %v221, %v220
    %v223 = vmul.f32 0.5, %v222
    %v224 = vsub.f32 1.5, %v223
    %v225 = vmul.f32 %v220, %v224
    %vm226 = vweird.f32 %v160
    %vm227 = vweird.f32 %v220
    %vm228 = vmor %vm226, %vm227
    %v229 = vsel %vm228, %v220, %v225
    %v230 = vrsqrt.pop %v163
    %v231 = vmul.f32 %v230, %v163
    %v232 = vmul.f32 %v231, %v230
    %v233 = vmul.f32 0.5, %v232
    %v234 = vsub.f32 1.5, %v233
    %v235 = vmul.f32 %v230, %v234
    %vm236 = vweird.f32 %v163
    %vm237 = vweird.f32 %v230
    %vm238 = vmor %vm236, %vm237
    %v239 = vsel %vm238, %v230, %v235
    %v240 = vrsqrt.pop %v166
    %v241 = vmul.f32 %v240, %v166
    %v242 = vmul.f32 %v241, %v240
    %v243 = vmul.f32 0.5, %v242
    %v244 = vsub.f32 1.5, %v243
    %v245 = vmul.f32 %v240, %v244
    %vm246 = vweird.f32 %v166
    %vm247 = vweird.f32 %v240
    %vm248 = vmor %vm246, %vm247
    %v249 = vsel %vm248, %v240, %v245
    %v250 = vrsqrt.pop %v169
    %v251 = vmul.f32 %v250, %v169
    %v252 = vmul.f32 %v251, %v250
    %v253 = vmul.f32 0.5, %v252
    %v254 = vsub.f32 1.5, %v253
    %v255 = vmul.f32 %v250, %v254
    %vm256 = vweird.f32 %v169
    %vm257 = vweird.f32 %v250
    %vm258 = vmor %vm256, %vm257
    %v259 = vsel %vm258, %v250, %v255
    %v260 = vrsqrt.pop %v172
    %v261 = vmul.f32 %v260, %v172
    %v262 = vmul.f32 %v261, %v260
    %v263 = vmul.f32 0.5, %v262
    %v264 = vsub.f32 1.5, %v263
    %v265 = vmul.f32 %v260, %v264
    %vm266 = vweird.f32 %v172
    %vm267 = vweird.f32 %v260
    %vm268 = vmor %vm266, %vm267
    %v269 = vsel %vm268, %v260, %v265
    %v270 = vrsqrt.pop %v175
    %v271 = vmul.f32 %v270, %v175
    %v272 = vmul.f32 %v271, %v270
    %v273 = vmul.f32 0.5, %v272
    %v274 = vsub.f32 1.5, %v273
    %v275 = vmul.f32 %v270, %v274
    %vm276 = vweird.f32 %v175
    %vm277 = vweird.f32 %v270
    %vm278 = vmor %vm276, %vm277
    %v279 = vsel %vm278, %v270, %v275
    %v280 = vrsqrt.pop %v178
    %v281 = vmul.f32 %v280, %v178
    %v282 = vmul.f32 %v281, %v280
    %v283 = vmul.f32 0.5, %v282
    %v284 = vsub.f32 1.5, %v283
    %v285 = vmul.f32 %v280, %v284
    %vm286 = vweird.f32 %v178
    %vm287 = vweird.f32 %v280
    %vm288 = vmor %vm286, %vm287
    %v289 = vsel %vm288, %v280, %v285
    %v290 = vrsqrt.pop %v181
    %v291 = vmul.f32 %v290, %v181
    %v292 = vmul.f32 %v291, %v290
    %v293 = vmul.f32 0.5, %v292
    %v294 = vsub.f32 1.5, %v293
    %v295 = vmul.f32 %v290, %v294
    %vm296 = vweird.f32 %v181
    %vm297 = vweird.f32 %v290
    %vm298 = vmor %vm296, %vm297
    %v299 = vsel %vm298, %v290, %v295
    %v300 = vrsqrt.pop %v184
    %v301 = vmul.f32 %v300, %v184
    %v302 = vmul.f32 %v301, %v300
    %v303 = vmul.f32 0.5, %v302
    %v304 = vsub.f32 1.5, %v303
    %v305 = vmul.f32 %v300, %v304
    %vm306 = vweird.f32 %v184
    %vm307 = vweird.f32 %v300
    %vm308 = vmor %vm306, %vm307
    %v309 = vsel %vm308, %v300, %v305
    %v310 = vrsqrt.pop %v187
    %v311 = vmul.f32 %v310, %v187
    %v312 = vmul.f32 %v311, %v310
    %v313 = vmul.f32 0.5, %v312
    %v314 = vsub.f32 1.5, %v313
    %v315 = vmul.f32 %v310, %v314
    %vm316 = vweird.f32 %v187
    %vm317 = vweird.f32 %v310
    %vm318 = vmor %vm316, %vm317
    %v319 = vsel %vm318, %v310, %v315
    %v320 = vrsqrt.pop %v190
    %v321 = vmul.f32 %v320, %v190
    %v322 = vmul.f32 %v321, %v320
    %v323 = vmul.f32 0.5, %v322
    %v324 = vsub.f32 1.5, %v323
    %v325 = vmul.f32 %v320, %v324
    %vm326 = vweird.f32 %v190
    %vm327 = vweird.f32 %v320
    %vm328 = vmor %vm326, %vm327
    %v329 = vsel %vm328, %v320, %v325
    %v330 = vrsqrt.pop %v193
    %v331 = vmul.f32 %v330, %v193
    %v332 = vmul.f32 %v331, %v330
    %v333 = vmul.f32 0.5, %v332
    %v334 = vsub.f32 1.5, %v333
    %v335 = vmul.f32 %v330, %v334
    %vm336 = vweird.f32 %v193
    %vm337 = vweird.f32 %v330
    %vm338 = vmor %vm336, %vm337
    %v339 = vsel %vm338, %v330, %v335
    %v340 = vrsqrt.pop %v196
    %v341 = vmul.f32 %v340, %v196
    %v342 = vmul.f32 %v341, %v340
    %v343 = vmul.f32 0.5, %v342
    %v344 = vsub.f32 1.5, %v343
    %v345 = vmul.f32 %v340, %v344
    %vm346 = vweird.f32 %v196
    %vm347 = vweird.f32 %v340
    %vm348 = vmor %vm346, %vm347
    %v349 = vsel %vm348, %v340, %v345
    %v350 = vrsqrt.pop %v199
    %v351 = vmul.f32 %v350, %v199
    %v352 = vmul.f32 %v351, %v350
    %v353 = vmul.f32 0.5, %v352
    %v354 = vsub.f32 1.5, %v353
    %v355 = vmul.f32 %v350, %v354
    %vm356 = vweird.f32 %v199
    %vm357 = vweird.f32 %v350
    %vm358 = vmor %vm356, %vm357
    %v359 = vsel %vm358, %v350, %v355
    %v360 = vmul.f32 %v103, %v125
    %v361 = vmul.f32 %v106, %v135
    %362 = vxpose.xlu0.b32.start [1/16] %v209, 128
    %363 = vxpose.xlu0.b32.cont [2/16] %v219, 128
    %364 = vxpose.xlu0.b32.cont [3/16] %v229, 128
    %365 = vxpose.xlu0.b32.cont [4/16] %v239, 128
    %366 = vxpose.xlu0.b32.cont [5/16] %v249, 128
    %367 = vxpose.xlu0.b32.cont [6/16] %v259, 128
    %368 = vxpose.xlu0.b32.cont [7/16] %v269, 128
    %369 = vxpose.xlu0.b32.cont [8/16] %v279, 128
    %370 = vxpose.xlu0.b32.cont [9/16] %v289, 128
    %371 = vxpose.xlu0.b32.cont [10/16] %v299, 128
    %372 = vxpose.xlu0.b32.cont [11/16] %v309, 128
    %373 = vxpose.xlu0.b32.cont [12/16] %v319, 128
    %374 = vxpose.xlu0.b32.cont [13/16] %v329, 128
    %375 = vxpose.xlu0.b32.cont [14/16] %v339, 128
    %376 = vxpose.xlu0.b32.cont [15/16] %v349, 128
    %377 = vxpose.xlu0.b32.end [16/16] %v359, 128
    %v378 = vpop.trf.xlu0
    %v379 = vpop.trf.xlu0
    %v380 = vpop.trf.xlu0
    %v381 = vpop.trf.xlu0
    %v382 = vpop.trf.xlu0
    %v383 = vpop.trf.xlu0
    %v384 = vpop.trf.xlu0
    %v385 = vpop.trf.xlu0
    %v386 = vpop.trf.xlu0
    %v387 = vpop.trf.xlu0
    %v388 = vpop.trf.xlu0
    %v389 = vpop.trf.xlu0
    %v390 = vpop.trf.xlu0
    %v391 = vpop.trf.xlu0
    %v392 = vpop.trf.xlu0
    %v393 = vpop.trf.xlu0
    %v394 = vperm.slane %v378, 0
    %v395 = vmul.f32 %v360, %v394
    %v396 = vmul.f32 %v361, %v394
    %397 = vst [vmem:[#allocation2] sm:$0xff] %v395
    %398 = vst [vmem:[#allocation2 + $0x8] sm:$0xff] %v396
    // Predicated region
    $region10: #{tpu_custom_call.1} parent=1 // pred_check
      _
    $region11: #{tpu_custom_call.1} parent=1 // pred_check_branch
      %400 = sbr.rel (0) target = $region13
    $region12: #{tpu_custom_call.1} parent=1 // pred_region
      %402 = vsyncadd [#allocation3], 0
      %s403 = sshll.u32 [#allocation2], 4
      %s404 = int_to_ptr.vmem [resolvable:$true] %s403
      %s405 = sshll.u32 %s2, 4
      %s406 = int_to_ptr.hbm [resolvable:$true] %s405
      %411 = dma.vmem_to_hbm [thread:$0]  %s404, 256, %s406, [#allocation3], 128, 128, 8
    $region13: #{tpu_custom_call.1} parent=1 // pred_fallthru
      _
    // Predicated region
    $region14: #{tpu_custom_call.1} parent=1 // pred_check
      _
    $region15: #{tpu_custom_call.1} parent=1 // pred_check_branch
      %413 = sbr.rel (0) target = $region17
    $region16: #{tpu_custom_call.1} parent=1 // pred_region
      %415 = dma.done [#allocation3], 256
    $region17: #{tpu_custom_call.1} parent=1 // pred_fallthru
      _
    %416 = vsyncpa [#allocation3], 1

</llo_original>
